<compile_context>
chip_gen: v7x
topology: tpu7x:2x2x1
jax: 0.10.0
libtpu: 0.0.40
codegen_flags: <defaults>
</compile_context>

<pallas_src>
import jax
import jax.numpy as jnp
from jax.experimental import pallas as pl
from jax.experimental.pallas import tpu as pltpu


_LANE_WIDTH = 1024                    # lane-dense last dim (multiple of 128)
_TARGET_TILE_BYTES = 2 * 1024 * 1024  # ~2 MiB tiles: ~85%+ of HBM roofline; with
                                      # double-buffered in+out (~4x tile = 8 MiB)
                                      # fits the scoped-VMEM default on v5e/v6e/v7x.


def _linreg_kernel(w_ref, b_ref, x_ref, o_ref):
    # w_ref / b_ref are (1,) f32 scalars in SMEM (read once per grid step).
    # Memory-bound elementwise stream: VPU mul+add is fully hidden under HBM DMA.
    o_ref[...] = w_ref[0] * x_ref[...] + b_ref[0]


def _round_up(n: int, m: int) -> int:
    return ((n + m - 1) // m) * m


def linear_regression_forward(x: jax.Array, weights: jax.Array, bias: jax.Array) -> jax.Array:
    """y = weights * x + bias (elementwise), computed in a Pallas TPU kernel.

    Works for any input shape / element count:
      * x is flattened and viewed as a (rows, 1024) lane-dense slab
      * rows are padded up to a multiple of the block size (padding sliced off
        after the call), so there is no divisibility requirement on the caller
      * block size targets ~2 MiB; small inputs collapse to a single full-extent
        block, mid-size inputs are split into >=2 blocks so both v7x TensorCores
        get work on the "parallel" grid axis.
    """
    orig_shape = x.shape
    dtype = x.dtype
    flat = x.reshape(-1)
    n = flat.shape[0]

    w = _LANE_WIDTH
    itemsize = jnp.dtype(dtype).itemsize
    rows = pl.cdiv(n, w)

    rows_target = max(1, _TARGET_TILE_BYTES // (w * itemsize))
    if rows > rows_target:
        # Large input: ~2 MiB tiles, sublane (8) aligned -> many parallel steps.
        block_rows = max(8, (rows_target // 8) * 8)
    elif rows >= 16:
        # Whole array fits well under the tile budget: split into >=2 blocks so
        # the parallel grid axis can be sharded across v7x's 2 TensorCores.
        block_rows = _round_up(pl.cdiv(rows, 2), 8)
    else:
        # Tiny input: single full-extent block, 1-step grid (minimal overhead).
        block_rows = rows

    rows_padded = _round_up(rows, block_rows)
    n_padded = rows_padded * w
    if n_padded != n:
        flat = jnp.pad(flat, (0, n_padded - n))
    x2 = flat.reshape(rows_padded, w)

    grid = (rows_padded // block_rows,)

    out2 = pl.pallas_call(
        _linreg_kernel,
        out_shape=jax.ShapeDtypeStruct((rows_padded, w), dtype),
        grid_spec=pltpu.PrefetchScalarGridSpec(
            num_scalar_prefetch=0,
            grid=grid,
            in_specs=[
                pl.BlockSpec(memory_space=pltpu.MemorySpace.SMEM),   # weights (1,)
                pl.BlockSpec(memory_space=pltpu.MemorySpace.SMEM),   # bias    (1,)
                pl.BlockSpec((block_rows, w), lambda i: (i, 0)),     # x tile
            ],
            out_specs=pl.BlockSpec((block_rows, w), lambda i: (i, 0)),
        ),
        compiler_params=pltpu.CompilerParams(
            dimension_semantics=("parallel",)),
    )(weights, bias, x2)

    y = out2.reshape(-1)
    if n_padded != n:
        y = y[:n]
    return y.reshape(orig_shape)


if __name__ == "__main__":
    key = jax.random.PRNGKey(0)
    k_w, k_b, k_x = jax.random.split(key, 3)

    # Deterministic "torch.randn(1)"-style parameters.
    weights = jax.random.normal(k_w, (1,), dtype=jnp.float32)
    bias = jax.random.normal(k_b, (1,), dtype=jnp.float32)

    # Small input consistent with an elementwise linear-regression forward.
    x = jax.random.normal(k_x, (8, 128), dtype=jnp.float32)
    y = jax.block_until_ready(linear_regression_forward(x, weights, bias))
    y_ref = weights[0] * x + bias[0]
    assert jnp.allclose(y, y_ref, atol=1e-6, rtol=1e-6)

    # Extra check exercising the padding + multi-step-grid path (non-aligned shape).
    x_odd = jax.random.normal(k_x, (40, 1000), dtype=jnp.float32)
    y_odd = jax.block_until_ready(linear_regression_forward(x_odd, weights, bias))
    assert jnp.allclose(y_odd, weights[0] * x_odd + bias[0], atol=1e-6, rtol=1e-6)

    print("KERNEL_OK")
</pallas_src>

<mosaic_0001>
module attributes {stable_mosaic.version = 11 : i64} {
  func.func @_linreg_kernel(%arg0: i32, %arg1: memref<1xf32, #tpu.memory_space<smem>>, %arg2: memref<1xf32, #tpu.memory_space<smem>>, %arg3: memref<1x1024xf32, #tpu.memory_space<vmem>>, %arg4: memref<1x1024xf32, #tpu.memory_space<vmem>>) attributes {dimension_semantics = [#tpu.dimension_semantics<parallel>], iteration_bounds = array<i64: 1>, scalar_prefetch = 0 : i64, scratch_operands = 0 : i64, tpu.core_type = #tpu.core_type<tc>, window_params = [{transform_indices = @transform_0, window_bounds = array<i64: 1>}, {transform_indices = @transform_1, window_bounds = array<i64: 1>}, {transform_indices = @transform_2, window_bounds = array<i64: 1, 1024>}, {transform_indices = @transform_3, window_bounds = array<i64: 1, 1024>}]} {
    %c0 = arith.constant 0 : index
    %0 = memref.load %arg1[%c0] : memref<1xf32, #tpu.memory_space<smem>>
    %c0_0 = arith.constant 0 : index
    %c0_1 = arith.constant 0 : index
    %1 = vector.load %arg3[%c0_0, %c0_1] : memref<1x1024xf32, #tpu.memory_space<vmem>>, vector<1x1024xf32>
    %2 = vector.broadcast %0 : f32 to vector<1x1024xf32>
    %3 = arith.mulf %2, %1 : vector<1x1024xf32>
    %c0_2 = arith.constant 0 : index
    %4 = memref.load %arg2[%c0_2] : memref<1xf32, #tpu.memory_space<smem>>
    %5 = vector.broadcast %4 : f32 to vector<1x1024xf32>
    %6 = arith.addf %3, %5 : vector<1x1024xf32>
    %c0_3 = arith.constant 0 : index
    %c0_4 = arith.constant 0 : index
    %7 = vector.load %arg4[%c0_3, %c0_4] : memref<1x1024xf32, #tpu.memory_space<vmem>>, vector<1x1024xf32>
    tpu.vector_store %arg4[%c0_3, %c0_4], %6 {strides = array<i32>} : memref<1x1024xf32, #tpu.memory_space<vmem>>, vector<1x1024xf32>,
    return
  }
  func.func @transform_0(%arg0: i32) -> i32 {
    %c0_i32 = arith.constant 0 : i32
    %c0_i32_0 = arith.constant 0 : i32
    return %c0_i32 : i32
  }
  func.func @transform_1(%arg0: i32) -> i32 {
    %c0_i32 = arith.constant 0 : i32
    %c0_i32_0 = arith.constant 0 : i32
    return %c0_i32 : i32
  }
  func.func @transform_2(%arg0: i32) -> (i32, i32) {
    %c0_i32 = arith.constant 0 : i32
    %c0_i32_0 = arith.constant 0 : i32
    return %arg0, %c0_i32 : i32, i32
  }
  func.func @transform_3(%arg0: i32) -> (i32, i32) {
    %c0_i32 = arith.constant 0 : i32
    %c0_i32_0 = arith.constant 0 : i32
    return %arg0, %c0_i32 : i32, i32
  }
}

</mosaic_0001>

<llo_original>
// kernel: tpu_custom_call.1
$region0: #{tpu_custom_call.1}
  #allocation0 [shape = 'u32[]', space=smem, size = 0x4, offset = 0x4, fixed_abs, tag = 'smem constant byte address 0x4 - core index']
  #allocation1 [shape = 'u32[144,128]{1,0:T(1,128)}', space=vmem, size = 0x12000, scoped, tag = 'internal scratch']
  #allocation2 [shape = 'f32[1]{0:T(128)S(6)}', space=smem, size = 0x200, scoped, tag = 'scoped memory for tpu_custom_call.1']
  #allocation3 [shape = 'f32[1]{0:T(128)S(6)}', space=smem, size = 0x200, scoped, tag = 'scoped memory for tpu_custom_call.1']
  %s0 = inlined_call_operand.<no memory space> [shape: f32[1], index: 0, kind: input, shape index: {}]
  %s1 = inlined_call_operand.<no memory space> [shape: f32[1], index: 1, kind: input, shape index: {}]
  %s2 = inlined_call_operand.hbm [shape: f32[1,1024], index: 2, kind: input, shape index: {}]
  %s3 = inlined_call_operand.hbm [shape: f32[1,1024], index: 3, kind: output, shape index: {}]
  %s4 = sld [smem:[#allocation0]]
  $region26: #{tpu_custom_call.1} parent=0
    _
  %s6 = ssub.s32 1, %s4
  %s7 = scalar_select 0, %s6, %s4
  %8 = sst [smem:[#allocation2]] %s0
  %9 = sst [smem:[#allocation3]] %s1
  $region1: #{tpu_custom_call.1} parent=0
    #allocation4 [shape = 'u8[4096]{0}', space=vmem, size = 0x1000, scoped, tag = 'input window, operand 2, single buffered']
    #allocation5 [shape = 's32[1]{0}', space=sflag, size = 0x4, scoped, tag = 'scoped memory for tpu_custom_call.1']
    #allocation6 [shape = 's32[1]{0}', space=sflag, size = 0x4, scoped, tag = 'scoped memory for tpu_custom_call.1']
    #allocation7 [shape = 'u8[4096]{0}', space=vmem, size = 0x1000, scoped, tag = 'output window, operand 0, single buffered']
    %10 = vsyncpa [#allocation5], 0
    %11 = vsyncpa [#allocation6], 0
    // Predicated region
    $region2: #{tpu_custom_call.1} parent=1 // pred_check
      _
    $region3: #{tpu_custom_call.1} parent=1 // pred_check_branch
      %13 = sbr.rel (0) target = $region5
    $region4: #{tpu_custom_call.1} parent=1 // pred_region
      _
    $region5: #{tpu_custom_call.1} parent=1 // pred_fallthru
      _
    // Predicated region
    $region6: #{tpu_custom_call.1} parent=1 // pred_check
      _
    $region7: #{tpu_custom_call.1} parent=1 // pred_check_branch
      %15 = sbr.rel (0) target = $region9
    $region8: #{tpu_custom_call.1} parent=1 // pred_region
      _
    $region9: #{tpu_custom_call.1} parent=1 // pred_fallthru
      _
    // Predicated region
    $region10: #{tpu_custom_call.1} parent=1 // pred_check
      _
    $region11: #{tpu_custom_call.1} parent=1 // pred_check_branch
      %17 = sbr.rel (0) target = $region13
    $region12: #{tpu_custom_call.1} parent=1 // pred_region
      %s19 = ssub.s32 128, 128
      %20 = vsyncadd [#allocation5], %s19
      %s22 = sshll.u32 [#allocation4], 4
      %s23 = int_to_ptr.vmem [resolvable:$true] %s22
      %25 = dma.hbm_to_vmem [thread:$0]  %s2, 128, %s23, [#allocation5]
    $region13: #{tpu_custom_call.1} parent=1 // pred_fallthru
      _
    // Predicated region
    $region14: #{tpu_custom_call.1} parent=1 // pred_check
      _
    $region15: #{tpu_custom_call.1} parent=1 // pred_check_branch
      %27 = sbr.rel (0) target = $region17
    $region16: #{tpu_custom_call.1} parent=1 // pred_region
      %28 = dma.done [#allocation5], 128
    $region17: #{tpu_custom_call.1} parent=1 // pred_fallthru
      _
    %s29 = sld [smem:[#allocation2]]
    %v30 = vld [vmem:[#allocation4] sm:$0xff]
    %v31 = vstv %s29
    %v32 = vmul.f32 %v31, %v30
    %s33 = sld [smem:[#allocation3]]
    %v34 = vstv %s33
    %v35 = vadd.f32 %v32, %v34
    %36 = vst [vmem:[#allocation7] sm:$0xff] %v35
    // Predicated region
    $region18: #{tpu_custom_call.1} parent=1 // pred_check
      _
    $region19: #{tpu_custom_call.1} parent=1 // pred_check_branch
      %38 = sbr.rel (0) target = $region21
    $region20: #{tpu_custom_call.1} parent=1 // pred_region
      %s40 = ssub.s32 128, 128
      %41 = vsyncadd [#allocation6], %s40
      %s43 = sshll.u32 [#allocation7], 4
      %s44 = int_to_ptr.vmem [resolvable:$true] %s43
      %46 = dma.vmem_to_hbm [thread:$0]  %s44, 128, %s3, [#allocation6]
    $region21: #{tpu_custom_call.1} parent=1 // pred_fallthru
      _
    // Predicated region
    $region22: #{tpu_custom_call.1} parent=1 // pred_check
      _
    $region23: #{tpu_custom_call.1} parent=1 // pred_check_branch
      %48 = sbr.rel (0) target = $region25
    $region24: #{tpu_custom_call.1} parent=1 // pred_region
      %49 = dma.done [#allocation6], 128
    $region25: #{tpu_custom_call.1} parent=1 // pred_fallthru
      _
    %50 = vsyncpa [#allocation5], 1
    %51 = vsyncpa [#allocation6], 1

</llo_original>
